<compile_context>
chip_gen: v7x
topology: tpu7x:2x2x1
jax: 0.10.0
libtpu: 0.0.40
codegen_flags: <defaults>
</compile_context>

<pallas_src>
import jax
import jax.numpy as jnp
from jax.experimental import pallas as pl
from jax.experimental.pallas import tpu as pltpu

_F32 = 4
_BF16 = 2
_SLACK = 2 * 1024 * 1024

_SELU_SCALE = 1.0507009873554805
_SELU_ALPHA = 1.6732632423543772


def _rup(x, m):
    return ((x + m - 1) // m) * m


# --------------------------- generation-aware VMEM budget -------------------------
def _vmem_capacity_bytes():
    try:
        cap = int(pltpu.get_tpu_info().vmem_capacity_bytes)
        if cap > 0:
            return cap
    except Exception:
        pass
    return 64 * 1024 * 1024  # conservative fallback (v7x per-TensorCore VMEM)


def _vmem_budget_and_limit():
    cap = _vmem_capacity_bytes()
    budget = (cap * 3) // 4                                   # tile-derivation budget
    limit = min((cap * 13) // 16, cap - 4 * 1024 * 1024)      # scoped VMEM limit
    return budget, max(limit, 16 * 1024 * 1024)


def _largest_div128(total, cap):
    best = 128
    t = 128
    lim = min(total, cap)
    while t <= lim:
        if total % t == 0:
            best = t
        t += 128
    return best


def _choose_tk(kp, per_tk_bytes, fixed_bytes, budget):
    """Largest multiple of 128 dividing kp whose footprint fits the VMEM budget."""
    best = 128
    t = 128
    while t <= kp:
        if kp % t == 0 and fixed_bytes + per_tk_bytes * t <= budget:
            best = t
        t += 128
    return best


# --------------------------- spectral norm (plain-JAX glue) -----------------------
def _l2normalize(v, eps=1e-12):
    return v / (jnp.linalg.norm(v) + eps)


def _spectral_sigma(w, u, power_iterations=1):
    # TODO(synk): PyTorch SpectralNorm updates its u/v buffers in place every forward;
    # here the power iteration is functional and only sigma is used.
    h = w.shape[0]
    w2 = w.reshape(h, -1)
    v = None
    for _ in range(power_iterations):
        v = _l2normalize(jnp.matmul(w2.T, u))
        u = _l2normalize(jnp.matmul(w2, v))
    return jnp.dot(u, jnp.matmul(w2, v))


# --------------------------- activation -------------------------------------------
def _apply_act(y, activation, alpha):
    if activation == 'relu':
        return jnp.maximum(y, 0.0)
    if activation == 'lrelu':
        return jnp.where(y > 0.0, y, 0.2 * y)
    if activation == 'prelu':
        return jnp.where(y > 0.0, y, alpha * y)
    if activation == 'selu':
        return _SELU_SCALE * jnp.where(y > 0.0, y, _SELU_ALPHA * (jnp.exp(y) - 1.0))
    if activation == 'tanh':
        return jnp.tanh(y)
    assert activation == 'none', activation
    return y


# --------------------------- kernels ------------------------------------------------
def _build_dense_kernel(activation):
    """'none'/'sn': y = act(x @ W^T + b).  3-D grid (M, N, K), accumulate into o_ref."""
    use_alpha = activation == 'prelu'

    def body(x_ref, wt_ref, b_ref, o_ref, alpha):
        k = pl.program_id(2)

        @pl.when(k == 0)
        def _():
            o_ref[...] = jnp.zeros_like(o_ref)

        o_ref[...] += jnp.dot(x_ref[...].astype(jnp.bfloat16), wt_ref[...],
                              preferred_element_type=jnp.float32)

        @pl.when(k == pl.num_programs(2) - 1)
        def _():
            o_ref[...] = _apply_act(o_ref[...] + b_ref[...], activation, alpha)

    if use_alpha:
        def kernel(a_ref, x_ref, wt_ref, b_ref, o_ref):
            body(x_ref, wt_ref, b_ref, o_ref, a_ref[0])
    else:
        def kernel(x_ref, wt_ref, b_ref, o_ref):
            body(x_ref, wt_ref, b_ref, o_ref, None)
    return kernel


def _build_rownorm_kernel(norm, activation, *, n_valid, n_pad, eps):
    """'ln' / 'in': fused matmul + bias + per-row normalization + activation."""
    use_alpha = activation == 'prelu'
    affine = norm == 'ln'

    def body(x_ref, wt_ref, b_ref, g_ref, bt_ref, o_ref, alpha):
        k = pl.program_id(1)

        @pl.when(k == 0)
        def _():
            o_ref[...] = jnp.zeros_like(o_ref)

        o_ref[...] += jnp.dot(x_ref[...].astype(jnp.bfloat16), wt_ref[...],
                              preferred_element_type=jnp.float32)

        @pl.when(k == pl.num_programs(1) - 1)
        def _():
            y = o_ref[...] + b_ref[...]
            if n_pad > n_valid:
                lane = jax.lax.broadcasted_iota(jnp.int32, y.shape, 1)
                mask = (lane < n_valid).astype(jnp.float32)
                ym = y * mask
            else:
                mask = None
                ym = y
            n = float(n_valid)
            mean = jnp.sum(ym, axis=1, keepdims=True) / n
            d = y - mean
            dm = d * mask if mask is not None else d
            if norm == 'ln':
                # custom LayerNorm: per-row UNBIASED std, x_hat = (x - mu) / (std + eps)
                var = jnp.sum(dm * dm, axis=1, keepdims=True) / float(max(n_valid - 1, 1))
                yn = d * (1.0 / (jnp.sqrt(var) + eps))
                yn = yn * g_ref[...] + bt_ref[...]
            else:
                # nn.InstanceNorm1d on a 2D (B, C) input: per-row biased var, no affine
                var = jnp.sum(dm * dm, axis=1, keepdims=True) / n
                yn = d * jax.lax.rsqrt(var + eps)
            o_ref[...] = _apply_act(yn, activation, alpha)

    if affine and use_alpha:
        def kernel(a_ref, x_ref, wt_ref, b_ref, g_ref, bt_ref, o_ref):
            body(x_ref, wt_ref, b_ref, g_ref, bt_ref, o_ref, a_ref[0])
    elif affine:
        def kernel(x_ref, wt_ref, b_ref, g_ref, bt_ref, o_ref):
            body(x_ref, wt_ref, b_ref, g_ref, bt_ref, o_ref, None)
    elif use_alpha:
        def kernel(a_ref, x_ref, wt_ref, b_ref, o_ref):
            body(x_ref, wt_ref, b_ref, None, None, o_ref, a_ref[0])
    else:
        def kernel(x_ref, wt_ref, b_ref, o_ref):
            body(x_ref, wt_ref, b_ref, None, None, o_ref, None)
    return kernel


def _build_bn_matmul_kernel(*, m_valid, m_pad, tm):
    """bn pass 1: y = x @ W^T + b plus per-feature batch sum / sum-of-squares."""

    def kernel(x_ref, wt_ref, b_ref, y_ref, s_ref, ss_ref):
        i = pl.program_id(0)
        k = pl.program_id(1)

        @pl.when(k == 0)
        def _():
            y_ref[...] = jnp.zeros_like(y_ref)

        y_ref[...] += jnp.dot(x_ref[...].astype(jnp.bfloat16), wt_ref[...],
                              preferred_element_type=jnp.float32)

        @pl.when(k == pl.num_programs(1) - 1)
        def _():
            y = y_ref[...] + b_ref[...]
            y_ref[...] = y
            if m_pad > m_valid:
                row = jax.lax.broadcasted_iota(jnp.int32, y.shape, 0) + i * tm
                ym = y * (row < m_valid).astype(jnp.float32)
            else:
                ym = y
            ps = jnp.sum(ym, axis=0, keepdims=True)
            pss = jnp.sum(ym * ym, axis=0, keepdims=True)

            @pl.when(i == 0)
            def _():
                s_ref[...] = ps
                ss_ref[...] = pss

            @pl.when(i > 0)
            def _():
                s_ref[...] += ps
                ss_ref[...] += pss

    return kernel


def _build_bn_apply_kernel(activation, *, m_valid, eps):
    """bn pass 2: normalize with batch stats, affine, activation."""
    # TODO(synk): training-mode batch statistics only; running mean/var buffers and
    # momentum updates are not produced.
    use_alpha = activation == 'prelu'
    inv_m = 1.0 / float(m_valid)

    def body(y_ref, s_ref, ss_ref, g_ref, bt_ref, o_ref, alpha):
        mean = s_ref[...] * inv_m
        var = jnp.maximum(ss_ref[...] * inv_m - mean * mean, 0.0)
        yn = (y_ref[...] - mean) * jax.lax.rsqrt(var + eps)
        yn = yn * g_ref[...] + bt_ref[...]
        o_ref[...] = _apply_act(yn, activation, alpha)

    if use_alpha:
        def kernel(a_ref, y_ref, s_ref, ss_ref, g_ref, bt_ref, o_ref):
            body(y_ref, s_ref, ss_ref, g_ref, bt_ref, o_ref, a_ref[0])
    else:
        def kernel(y_ref, s_ref, ss_ref, g_ref, bt_ref, o_ref):
            body(y_ref, s_ref, ss_ref, g_ref, bt_ref, o_ref, None)
    return kernel


# --------------------------- parameter preparation (one-time) ----------------------
def prepare_linear_block(params, *, norm='none'):
    """Hoisted out of the forward hot path: cache padded bf16 W^T and padded params."""
    w = params['w']
    b = params['b']
    N, K = w.shape
    Np, Kp = _rup(N, 128), _rup(K, 128)

    wt = w.T.astype(jnp.bfloat16)                     # (K, N) so the kernel does x @ W^T
    if (Kp, Np) != (K, N):
        wt = jnp.pad(wt, ((0, Kp - K), (0, Np - N)))
    bias = b.astype(jnp.float32).reshape(1, N)
    if Np != N:
        bias = jnp.pad(bias, ((0, 0), (0, Np - N)))

    prep = {'norm': norm, 'N': N, 'K': K, 'Np': Np, 'Kp': Kp, 'wt': wt, 'bias': bias}
    if norm in ('ln', 'bn'):
        g = params['gamma'].astype(jnp.float32).reshape(1, N)
        bt = params['beta'].astype(jnp.float32).reshape(1, N)
        if Np != N:
            g = jnp.pad(g, ((0, 0), (0, Np - N)))
            bt = jnp.pad(bt, ((0, 0), (0, Np - N)))
        prep['gamma'] = g
        prep['beta'] = bt
    if norm == 'sn':
        prep['w_raw'] = w.astype(jnp.float32)
        prep['u'] = params['u'].astype(jnp.float32)
    return prep


# --------------------------- forward ------------------------------------------------
def linear_block_apply(x, prep, *, activation='relu', eps=1e-5, prelu_alpha=0.25):
    """LinearBlock forward: y = act(norm(x @ W.T + b)) using prepared params."""
    norm = prep['norm']
    N, K, Np, Kp = prep['N'], prep['K'], prep['Np'], prep['Kp']
    M = x.shape[0]
    assert x.shape[1] == K

    xw = x.astype(jnp.float32)
    if norm == 'sn':
        # (x / sigma) @ W^T == x @ (W / sigma)^T ; the bias is not scaled.
        sigma = _spectral_sigma(prep['w_raw'], prep['u'])
        xw = xw * (1.0 / sigma)
        kernel_norm = 'none'
    else:
        kernel_norm = norm

    budget, vmem_limit = _vmem_budget_and_limit()

    def cparams(sem):
        return pltpu.CompilerParams(dimension_semantics=sem,
                                    vmem_limit_bytes=vmem_limit)

    # ---- M tiling (f32 sublane = 8) ----
    tm = 128 if M >= 128 else _rup(M, 8)
    if kernel_norm in ('ln', 'in', 'bn'):
        # whole-N output block: shrink tm if the N-resident footprint busts the budget
        extra = 8 * Np * _F32
        while tm > 8 and 2 * tm * Np * _F32 + extra + _SLACK > budget:
            tm = max(8, (tm // 2) // 8 * 8)
    Mp = _rup(M, tm)
    Mt = Mp // tm

    if (Mp, Kp) != (M, K):
        xw = jnp.pad(xw, ((0, Mp - M), (0, Kp - K)))

    use_alpha = activation == 'prelu'
    alpha_args = [jnp.asarray(prelu_alpha, jnp.float32).reshape(1)] if use_alpha else []
    alpha_specs = ([pl.BlockSpec(memory_space=pltpu.MemorySpace.SMEM)]
                   if use_alpha else [])

    if kernel_norm == 'none':
        # N-tiled: second 'parallel' axis (v7x megacore) + bounded VMEM for large N.
        tn = _largest_div128(Np, 2048)
        if Mt == 1 and Np >= 256:
            tn = min(tn, _largest_div128(Np, Np // 2))
        Nt = Np // tn
        fixed = 2 * tm * tn * _F32 + 2 * tn * _F32 + _SLACK
        per_tk = 2 * tm * _F32 + 2 * tn * _BF16
        tk = _choose_tk(Kp, per_tk, fixed, budget)
        Kt = Kp // tk

        kernel = _build_dense_kernel(activation)
        out = pl.pallas_call(
            kernel,
            out_shape=jax.ShapeDtypeStruct((Mp, Np), jnp.float32),
            grid_spec=pltpu.PrefetchScalarGridSpec(
                num_scalar_prefetch=0,
                grid=(Mt, Nt, Kt),
                in_specs=alpha_specs + [
                    pl.BlockSpec((tm, tk), lambda i, j, k: (i, k)),
                    pl.BlockSpec((tk, tn), lambda i, j, k: (k, j)),
                    pl.BlockSpec((1, tn), lambda i, j, k: (0, j))],
                out_specs=pl.BlockSpec((tm, tn), lambda i, j, k: (i, j))),
            compiler_params=cparams(("parallel", "parallel", "arbitrary")),
        )(*alpha_args, xw, prep['wt'], prep['bias'])

    elif kernel_norm in ('ln', 'in'):
        affine = kernel_norm == 'ln'
        fixed = 2 * tm * Np * _F32 + (6 if affine else 2) * Np * _F32 + _SLACK
        per_tk = 2 * tm * _F32 + 2 * Np * _BF16
        tk = _choose_tk(Kp, per_tk, fixed, budget)
        Kt = Kp // tk

        kernel = _build_rownorm_kernel(kernel_norm, activation,
                                       n_valid=N, n_pad=Np, eps=eps)
        extra_args = [prep['gamma'], prep['beta']] if affine else []
        extra_specs = ([pl.BlockSpec((1, Np), lambda i, k: (0, 0)),
                        pl.BlockSpec((1, Np), lambda i, k: (0, 0))] if affine else [])
        out = pl.pallas_call(
            kernel,
            out_shape=jax.ShapeDtypeStruct((Mp, Np), jnp.float32),
            grid_spec=pltpu.PrefetchScalarGridSpec(
                num_scalar_prefetch=0,
                grid=(Mt, Kt),
                in_specs=alpha_specs + [
                    pl.BlockSpec((tm, tk), lambda i, k: (i, k)),
                    pl.BlockSpec((tk, Np), lambda i, k: (k, 0)),
                    pl.BlockSpec((1, Np), lambda i, k: (0, 0))] + extra_specs,
                out_specs=pl.BlockSpec((tm, Np), lambda i, k: (i, 0))),
            compiler_params=cparams(("parallel", "arbitrary")),
        )(*alpha_args, xw, prep['wt'], prep['bias'], *extra_args)

    else:  # 'bn' — two passes so the batch never has to be resident in one block
        fixed = 2 * tm * Np * _F32 + 6 * Np * _F32 + _SLACK
        per_tk = 2 * tm * _F32 + 2 * Np * _BF16
        tk = _choose_tk(Kp, per_tk, fixed, budget)
        Kt = Kp // tk

        k1 = _build_bn_matmul_kernel(m_valid=M, m_pad=Mp, tm=tm)
        y_lin, bsum, bsumsq = pl.pallas_call(
            k1,
            out_shape=(jax.ShapeDtypeStruct((Mp, Np), jnp.float32),
                       jax.ShapeDtypeStruct((1, Np), jnp.float32),
                       jax.ShapeDtypeStruct((1, Np), jnp.float32)),
            grid_spec=pltpu.PrefetchScalarGridSpec(
                num_scalar_prefetch=0,
                grid=(Mt, Kt),
                in_specs=[pl.BlockSpec((tm, tk), lambda i, k: (i, k)),
                          pl.BlockSpec((tk, Np), lambda i, k: (k, 0)),
                          pl.BlockSpec((1, Np), lambda i, k: (0, 0))],
                out_specs=[pl.BlockSpec((tm, Np), lambda i, k: (i, 0)),
                           pl.BlockSpec((1, Np), lambda i, k: (0, 0)),
                           pl.BlockSpec((1, Np), lambda i, k: (0, 0))]),
            compiler_params=cparams(("arbitrary", "arbitrary")),
        )(xw, prep['wt'], prep['bias'])

        k2 = _build_bn_apply_kernel(activation, m_valid=M, eps=eps)
        out = pl.pallas_call(
            k2,
            out_shape=jax.ShapeDtypeStruct((Mp, Np), jnp.float32),
            grid_spec=pltpu.PrefetchScalarGridSpec(
                num_scalar_prefetch=0,
                grid=(Mt,),
                in_specs=alpha_specs + [
                    pl.BlockSpec((tm, Np), lambda i: (i, 0)),
                    pl.BlockSpec((1, Np), lambda i: (0, 0)),
                    pl.BlockSpec((1, Np), lambda i: (0, 0)),
                    pl.BlockSpec((1, Np), lambda i: (0, 0)),
                    pl.BlockSpec((1, Np), lambda i: (0, 0))],
                out_specs=pl.BlockSpec((tm, Np), lambda i: (i, 0))),
            compiler_params=cparams(("parallel",)),
        )(*alpha_args, y_lin, bsum, bsumsq, prep['gamma'], prep['beta'])

    if (Mp, Np) != (M, N):
        out = out[:M, :N]
    return out


def linear_block(x, params, *, norm='none', activation='relu', eps=1e-5,
                 prelu_alpha=0.25):
    """One-shot convenience wrapper (prepares params then applies)."""
    prep = prepare_linear_block(params, norm=norm)
    return linear_block_apply(x, prep, activation=activation, eps=eps,
                              prelu_alpha=prelu_alpha)


# --------------------------- pure-JAX reference -------------------------------------
def _ref_linear_block(x, w, b, norm, activation, gamma=None, beta=None, u=None,
                      eps=1e-5, prelu_alpha=0.25):
    if norm == 'sn':
        w = w / _spectral_sigma(w, u)
    y = x @ w.T + b
    if norm == 'ln':
        mean = jnp.mean(y, axis=1, keepdims=True)
        std = jnp.std(y, axis=1, ddof=1, keepdims=True)
        y = (y - mean) / (std + eps)
        y = y * gamma + beta
    elif norm == 'bn':
        mean = jnp.mean(y, axis=0, keepdims=True)
        var = jnp.var(y, axis=0, keepdims=True)
        y = (y - mean) * jax.lax.rsqrt(var + eps)
        y = y * gamma + beta
    elif norm == 'in':
        mean = jnp.mean(y, axis=1, keepdims=True)
        var = jnp.var(y, axis=1, keepdims=True)
        y = (y - mean) * jax.lax.rsqrt(var + eps)
    if activation == 'relu':
        y = jnp.maximum(y, 0.0)
    elif activation == 'lrelu':
        y = jnp.where(y > 0, y, 0.2 * y)
    elif activation == 'prelu':
        y = jnp.where(y > 0, y, prelu_alpha * y)
    elif activation == 'selu':
        y = jax.nn.selu(y)
    elif activation == 'tanh':
        y = jnp.tanh(y)
    return y


# --------------------------- main ----------------------------------------------------
if __name__ == "__main__":
    key = jax.random.PRNGKey(0)
    k = jax.random.split(key, 10)

    # primary config (lane/sublane aligned -> no host-side padding)
    B, IN, OUT = 16, 512, 128
    x = jax.random.normal(k[0], (B, IN), jnp.float32)
    w = jax.random.normal(k[1], (OUT, IN), jnp.float32) * 0.05
    b = jax.random.normal(k[2], (OUT,), jnp.float32) * 0.01
    gamma = jax.random.uniform(k[3], (OUT,), jnp.float32)
    beta = 0.1 * jax.random.normal(k[4], (OUT,), jnp.float32)
    u = jax.random.normal(k[5], (OUT,), jnp.float32)

    # small unaligned config (exercises the masked-statistics paths)
    B2, IN2, OUT2 = 6, 48, 24
    x2 = jax.random.normal(k[6], (B2, IN2), jnp.float32)
    w2 = jax.random.normal(k[7], (OUT2, IN2), jnp.float32) * 0.2
    b2 = jax.random.normal(k[8], (OUT2,), jnp.float32) * 0.01
    gamma2 = jax.random.uniform(k[9], (OUT2,), jnp.float32)
    beta2 = jnp.zeros((OUT2,), jnp.float32)

    configs = [
        (x,  {'w': w,  'b': b,  'gamma': gamma,  'beta': beta},  'ln',   'relu'),
        (x,  {'w': w,  'b': b},                                  'none', 'tanh'),
        (x,  {'w': w,  'b': b,  'u': u},                         'sn',   'lrelu'),
        (x2, {'w': w2, 'b': b2, 'gamma': gamma2, 'beta': beta2}, 'bn',   'selu'),
        (x2, {'w': w2, 'b': b2},                                 'in',   'prelu'),
    ]

    for xi, p, norm, act in configs:
        prep = prepare_linear_block(p, norm=norm)           # one-time weight transform
        out = linear_block_apply(xi, prep, activation=act,
                                 prelu_alpha=jnp.float32(0.25))
        jax.block_until_ready(out)
        ref = _ref_linear_block(xi, p['w'], p['b'], norm, act,
                                gamma=p.get('gamma'), beta=p.get('beta'),
                                u=p.get('u'))
        assert out.shape == ref.shape, (norm, act, out.shape, ref.shape)
        assert bool(jnp.all(jnp.isfinite(out))), (norm, act)
        err = float(jnp.max(jnp.abs(out - ref)))
        assert err < 8e-2, (norm, act, err)

    print("KERNEL_OK")
</pallas_src>

<mosaic_0001>
module attributes {stable_mosaic.version = 11 : i64} {
  func.func @kernel(%arg0: i32, %arg1: i32, %arg2: memref<16x512xf32, #tpu.memory_space<vmem>>, %arg3: memref<512x128xbf16, #tpu.memory_space<vmem>>, %arg4: memref<1x128xf32, #tpu.memory_space<vmem>>, %arg5: memref<1x128xf32, #tpu.memory_space<vmem>>, %arg6: memref<1x128xf32, #tpu.memory_space<vmem>>, %arg7: memref<16x128xf32, #tpu.memory_space<vmem>>) attributes {dimension_semantics = [#tpu.dimension_semantics<parallel>, #tpu.dimension_semantics<arbitrary>], iteration_bounds = array<i64: 1, 1>, scalar_prefetch = 0 : i64, scratch_operands = 0 : i64, tpu.core_type = #tpu.core_type<tc>, window_params = [{transform_indices = @transform_0, window_bounds = array<i64: 16, 512>}, {transform_indices = @transform_1, window_bounds = array<i64: 512, 128>}, {pipeline_mode = #tpu.pipeline_mode<synchronous>, transform_indices = @transform_2, window_bounds = array<i64: 1, 128>}, {pipeline_mode = #tpu.pipeline_mode<synchronous>, transform_indices = @transform_3, window_bounds = array<i64: 1, 128>}, {pipeline_mode = #tpu.pipeline_mode<synchronous>, transform_indices = @transform_4, window_bounds = array<i64: 1, 128>}, {transform_indices = @transform_5, window_bounds = array<i64: 16, 128>}]} {
    %c0_i32 = arith.constant 0 : i32
    %0 = arith.cmpi eq, %arg1, %c0_i32 : i32
    %1 = arith.extui %0 : i1 to i32
    %c0_i32_0 = arith.constant 0 : i32
    %2 = arith.cmpi ne, %1, %c0_i32_0 : i32
    scf.if %2 {
      %cst_10 = arith.constant 0.000000e+00 : f32
      %13 = vector.broadcast %cst_10 : f32 to vector<16x128xf32>
      %c0_11 = arith.constant 0 : index
      %c0_12 = arith.constant 0 : index
      %14 = vector.load %arg7[%c0_11, %c0_12] : memref<16x128xf32, #tpu.memory_space<vmem>>, vector<16x128xf32>
      tpu.vector_store %arg7[%c0_11, %c0_12], %13 {strides = array<i32>} : memref<16x128xf32, #tpu.memory_space<vmem>>, vector<16x128xf32>,
    } else {
    }
    %c0 = arith.constant 0 : index
    %c0_1 = arith.constant 0 : index
    %3 = vector.load %arg7[%c0, %c0_1] : memref<16x128xf32, #tpu.memory_space<vmem>>, vector<16x128xf32>
    %c0_2 = arith.constant 0 : index
    %c0_3 = arith.constant 0 : index
    %4 = vector.load %arg2[%c0_2, %c0_3] : memref<16x512xf32, #tpu.memory_space<vmem>>, vector<16x512xf32>
    %5 = arith.truncf %4 : vector<16x512xf32> to vector<16x512xbf16>
    %c0_4 = arith.constant 0 : index
    %c0_5 = arith.constant 0 : index
    %6 = vector.load %arg3[%c0_4, %c0_5] : memref<512x128xbf16, #tpu.memory_space<vmem>>, vector<512x128xbf16>
    %cst = arith.constant dense<0.000000e+00> : vector<16x128xf32>
    %7 = tpu.matmul %5, %6, %cst {dimension_numbers = #tpu.dot_dimension_numbers<[1], [0], [0], [1], [0, 0, 1, 1], [], []>} : vector<16x512xbf16>, vector<512x128xbf16>, vector<16x128xf32> -> vector<16x128xf32>
    %8 = arith.addf %3, %7 : vector<16x128xf32>
    %c0_6 = arith.constant 0 : index
    %c0_7 = arith.constant 0 : index
    %9 = vector.load %arg7[%c0_6, %c0_7] : memref<16x128xf32, #tpu.memory_space<vmem>>, vector<16x128xf32>
    tpu.vector_store %arg7[%c0_6, %c0_7], %8 {strides = array<i32>} : memref<16x128xf32, #tpu.memory_space<vmem>>, vector<16x128xf32>,
    %c0_i32_8 = arith.constant 0 : i32
    %10 = arith.cmpi eq, %arg1, %c0_i32_8 : i32
    %11 = arith.extui %10 : i1 to i32
    %c0_i32_9 = arith.constant 0 : i32
    %12 = arith.cmpi ne, %11, %c0_i32_9 : i32
    scf.if %12 {
      %c0_10 = arith.constant 0 : index
      %c0_11 = arith.constant 0 : index
      %13 = vector.load %arg7[%c0_10, %c0_11] : memref<16x128xf32, #tpu.memory_space<vmem>>, vector<16x128xf32>
      %c0_12 = arith.constant 0 : index
      %c0_13 = arith.constant 0 : index
      %14 = vector.load %arg4[%c0_12, %c0_13] : memref<1x128xf32, #tpu.memory_space<vmem>>, vector<1x128xf32>
      %15 = vector.broadcast %14 : vector<1x128xf32> to vector<16x128xf32>
      %16 = arith.addf %13, %15 : vector<16x128xf32>
      %cst_14 = arith.constant dense<0.000000e+00> : vector<16xf32>
      %17 = vector.multi_reduction <add>, %16, %cst_14 [1] : vector<16x128xf32> to vector<16xf32>
      %18 = vector.shape_cast %17 : vector<16xf32> to vector<16x1xf32>
      %cst_15 = arith.constant 1.280000e+02 : f32
      %19 = vector.broadcast %cst_15 : f32 to vector<16x1xf32>
      %20 = arith.divf %18, %19 : vector<16x1xf32>
      %21 = vector.broadcast %20 : vector<16x1xf32> to vector<16x128xf32>
      %22 = arith.subf %16, %21 : vector<16x128xf32>
      %23 = arith.mulf %22, %22 : vector<16x128xf32>
      %cst_16 = arith.constant dense<0.000000e+00> : vector<16xf32>
      %24 = vector.multi_reduction <add>, %23, %cst_16 [1] : vector<16x128xf32> to vector<16xf32>
      %25 = vector.shape_cast %24 : vector<16xf32> to vector<16x1xf32>
      %cst_17 = arith.constant 1.270000e+02 : f32
      %26 = vector.broadcast %cst_17 : f32 to vector<16x1xf32>
      %27 = arith.divf %25, %26 : vector<16x1xf32>
      %28 = math.sqrt %27 : vector<16x1xf32>
      %cst_18 = arith.constant 9.99999974E-6 : f32
      %29 = vector.broadcast %cst_18 : f32 to vector<16x1xf32>
      %30 = arith.addf %28, %29 : vector<16x1xf32>
      %cst_19 = arith.constant 1.000000e+00 : f32
      %31 = vector.broadcast %cst_19 : f32 to vector<16x1xf32>
      %32 = arith.divf %31, %30 : vector<16x1xf32>
      %33 = vector.broadcast %32 : vector<16x1xf32> to vector<16x128xf32>
      %34 = arith.mulf %22, %33 : vector<16x128xf32>
      %c0_20 = arith.constant 0 : index
      %c0_21 = arith.constant 0 : index
      %35 = vector.load %arg5[%c0_20, %c0_21] : memref<1x128xf32, #tpu.memory_space<vmem>>, vector<1x128xf32>
      %36 = vector.broadcast %35 : vector<1x128xf32> to vector<16x128xf32>
      %37 = arith.mulf %34, %36 : vector<16x128xf32>
      %c0_22 = arith.constant 0 : index
      %c0_23 = arith.constant 0 : index
      %38 = vector.load %arg6[%c0_22, %c0_23] : memref<1x128xf32, #tpu.memory_space<vmem>>, vector<1x128xf32>
      %39 = vector.broadcast %38 : vector<1x128xf32> to vector<16x128xf32>
      %40 = arith.addf %37, %39 : vector<16x128xf32>
      %cst_24 = arith.constant 0.000000e+00 : f32
      %41 = vector.broadcast %cst_24 : f32 to vector<16x128xf32>
      %42 = arith.maximumf %40, %41 : vector<16x128xf32>
      %c0_25 = arith.constant 0 : index
      %c0_26 = arith.constant 0 : index
      %43 = vector.load %arg7[%c0_25, %c0_26] : memref<16x128xf32, #tpu.memory_space<vmem>>, vector<16x128xf32>
      tpu.vector_store %arg7[%c0_25, %c0_26], %42 {strides = array<i32>} : memref<16x128xf32, #tpu.memory_space<vmem>>, vector<16x128xf32>,
    } else {
    }
    return
  }
  func.func @transform_0(%arg0: i32, %arg1: i32) -> (i32, i32) {
    %c0_i32 = arith.constant 0 : i32
    return %arg0, %arg1 : i32, i32
  }
  func.func @transform_1(%arg0: i32, %arg1: i32) -> (i32, i32) {
    %c0_i32 = arith.constant 0 : i32
    %c0_i32_0 = arith.constant 0 : i32
    return %arg1, %c0_i32 : i32, i32
  }
  func.func @transform_2(%arg0: i32, %arg1: i32) -> (i32, i32) {
    %c0_i32 = arith.constant 0 : i32
    %c0_i32_0 = arith.constant 0 : i32
    %c0_i32_1 = arith.constant 0 : i32
    return %c0_i32, %c0_i32_0 : i32, i32
  }
  func.func @transform_3(%arg0: i32, %arg1: i32) -> (i32, i32) {
    %c0_i32 = arith.constant 0 : i32
    %c0_i32_0 = arith.constant 0 : i32
    %c0_i32_1 = arith.constant 0 : i32
    return %c0_i32, %c0_i32_0 : i32, i32
  }
  func.func @transform_4(%arg0: i32, %arg1: i32) -> (i32, i32) {
    %c0_i32 = arith.constant 0 : i32
    %c0_i32_0 = arith.constant 0 : i32
    %c0_i32_1 = arith.constant 0 : i32
    return %c0_i32, %c0_i32_0 : i32, i32
  }
  func.func @transform_5(%arg0: i32, %arg1: i32) -> (i32, i32) {
    %c0_i32 = arith.constant 0 : i32
    %c0_i32_0 = arith.constant 0 : i32
    return %arg0, %c0_i32 : i32, i32
  }
}

</mosaic_0001>

<llo_original>
// kernel: tpu_custom_call.1
$region0: #{tpu_custom_call.1}
  #allocation0 [shape = 'u32[]', space=smem, size = 0x4, offset = 0x4, fixed_abs, tag = 'smem constant byte address 0x4 - core index']
  #allocation1 [shape = 'u32[144,128]{1,0:T(1,128)}', space=vmem, size = 0x12000, scoped, tag = 'internal scratch']
  %s0 = inlined_call_operand.hbm [shape: f32[16,512], index: 0, kind: input, shape index: {}]
  %s1 = inlined_call_operand.hbm [shape: bf16[512,128], index: 1, kind: input, shape index: {}]
  %s2 = inlined_call_operand.vmem [shape: f32[1,128], index: 2, kind: input, shape index: {}]
  %s3 = inlined_call_operand.vmem [shape: f32[1,128], index: 3, kind: input, shape index: {}]
  %s4 = inlined_call_operand.vmem [shape: f32[1,128], index: 4, kind: input, shape index: {}]
  %s5 = inlined_call_operand.hbm [shape: f32[16,128], index: 5, kind: output, shape index: {}]
  %s6 = sld [smem:[#allocation0]]
  $region46: #{tpu_custom_call.1} parent=0
    _
  %s8 = ssub.s32 1, %s6
  %s9 = scalar_select 0, %s8, %s6
  $region1: #{tpu_custom_call.1} parent=0
    #allocation2 [shape = 'u8[32768]{0}', space=vmem, size = 0x8000, scoped, tag = 'input window, operand 0, single buffered']
    #allocation3 [shape = 's32[1]{0}', space=sflag, size = 0x4, scoped, tag = 'scoped memory for tpu_custom_call.1']
    #allocation4 [shape = 's32[1]{0}', space=sflag, size = 0x4, scoped, tag = 'scoped memory for tpu_custom_call.1']
    #allocation5 [shape = 'u8[131072]{0}', space=vmem, size = 0x20000, scoped, tag = 'input window, operand 1, single buffered']
    #allocation6 [shape = 's32[1]{0}', space=sflag, size = 0x4, scoped, tag = 'scoped memory for tpu_custom_call.1']
    #allocation7 [shape = 'u8[8192]{0}', space=vmem, size = 0x2000, scoped, tag = 'output window, operand 0, single buffered']
    %10 = vsyncpa [#allocation3], 0
    %11 = vsyncpa [#allocation6], 0
    %12 = vsyncpa [#allocation4], 0
    // Predicated region
    $region2: #{tpu_custom_call.1} parent=1 // pred_check
      _
    $region3: #{tpu_custom_call.1} parent=1 // pred_check_branch
      %14 = sbr.rel (0) target = $region5
    $region4: #{tpu_custom_call.1} parent=1 // pred_region
      %s16 = ssub.s32 1024, 1024
      %17 = vsyncadd [#allocation3], %s16
      %s18 = sshll.u32 [#allocation2], 4
      %s19 = int_to_ptr.vmem [resolvable:$true] %s18
      %24 = dma.hbm_to_vmem [thread:$0]  %s0, 1024, %s19, [#allocation3], 512, 512, 32
    $region5: #{tpu_custom_call.1} parent=1 // pred_fallthru
      _
    // Predicated region
    $region6: #{tpu_custom_call.1} parent=1 // pred_check
      _
    $region7: #{tpu_custom_call.1} parent=1 // pred_check_branch
      %26 = sbr.rel (0) target = $region9
    $region8: #{tpu_custom_call.1} parent=1 // pred_region
      %s28 = ssub.s32 4096, 4096
      %29 = vsyncadd [#allocation6], %s28
      %s30 = sshll.u32 [#allocation5], 4
      %s31 = int_to_ptr.vmem [resolvable:$true] %s30
      %36 = dma.hbm_to_vmem [thread:$0]  %s1, 4096, %s31, [#allocation6], 64, 64, 4
    $region9: #{tpu_custom_call.1} parent=1 // pred_fallthru
      _
    // Predicated region
    $region10: #{tpu_custom_call.1} parent=1 // pred_check
      _
    $region11: #{tpu_custom_call.1} parent=1 // pred_check_branch
      %38 = sbr.rel (0) target = $region13
    $region12: #{tpu_custom_call.1} parent=1 // pred_region
      _
    $region13: #{tpu_custom_call.1} parent=1 // pred_fallthru
      _
    // Predicated region
    $region14: #{tpu_custom_call.1} parent=1 // pred_check
      _
    $region15: #{tpu_custom_call.1} parent=1 // pred_check_branch
      %40 = sbr.rel (0) target = $region17
    $region16: #{tpu_custom_call.1} parent=1 // pred_region
      _
    $region17: #{tpu_custom_call.1} parent=1 // pred_fallthru
      _
    // Predicated region
    $region18: #{tpu_custom_call.1} parent=1 // pred_check
      _
    $region19: #{tpu_custom_call.1} parent=1 // pred_check_branch
      %42 = sbr.rel (0) target = $region21
    $region20: #{tpu_custom_call.1} parent=1 // pred_region
      _
    $region21: #{tpu_custom_call.1} parent=1 // pred_fallthru
      _
    // Predicated region
    $region22: #{tpu_custom_call.1} parent=1 // pred_check
      _
    $region23: #{tpu_custom_call.1} parent=1 // pred_check_branch
      %44 = sbr.rel (0) target = $region25
    $region24: #{tpu_custom_call.1} parent=1 // pred_region
      %45 = dma.done [#allocation3], 1024
    $region25: #{tpu_custom_call.1} parent=1 // pred_fallthru
      _
    // Predicated region
    $region26: #{tpu_custom_call.1} parent=1 // pred_check
      _
    $region27: #{tpu_custom_call.1} parent=1 // pred_check_branch
      %47 = sbr.rel (0) target = $region29
    $region28: #{tpu_custom_call.1} parent=1 // pred_region
      %48 = dma.done [#allocation6], 4096
    $region29: #{tpu_custom_call.1} parent=1 // pred_fallthru
      _
    %p50 = scmp.eq.s32.totalorder 0, 0
    // Predicated region
    $region30: #{tpu_custom_call.1} parent=1 // pred_check
      %p51 = pneg %p50
    $region31: #{tpu_custom_call.1} parent=1 // pred_check_branch
      %53 = sbr.rel (%p51) target = $region33
    $region32: #{tpu_custom_call.1} parent=1 // pred_region
      %54 = vst [vmem:[#allocation7] sm:$0xff] 0.0
      %55 = vst [vmem:[#allocation7 + $0x8] sm:$0xff] 0.0
    $region33: #{tpu_custom_call.1} parent=1 // pred_fallthru
      _
    %v56 = vld [vmem:[#allocation7] sm:$0xff]
    %v57 = vld [vmem:[#allocation7 + $0x8] sm:$0xff]
    %v58 = vld [vmem:[#allocation2] sm:$0xff]
    %v59 = vld [vmem:[#allocation2 + $0x8] sm:$0xff]
    %v60 = vld [vmem:[#allocation2 + $0x10] sm:$0xff]
    %v61 = vld [vmem:[#allocation2 + $0x18] sm:$0xff]
    %v62 = vld [vmem:[#allocation2 + $0x20] sm:$0xff]
    %v63 = vld [vmem:[#allocation2 + $0x28] sm:$0xff]
    %v64 = vld [vmem:[#allocation2 + $0x30] sm:$0xff]
    %v65 = vld [vmem:[#allocation2 + $0x38] sm:$0xff]
    %v66 = vpack.c.bf16 %v62, %v58
    %v67 = vpack.c.bf16 %v63, %v59
    %v68 = vpack.c.bf16 %v64, %v60
    %v69 = vpack.c.bf16 %v65, %v61
    %v70 = vld [vmem:[#allocation5] sm:$0xf]
    %v71 = vld [vmem:[#allocation5 + $0x4] sm:$0xf]
    %v72 = vld [vmem:[#allocation5 + $0x8] sm:$0xf]
    %v73 = vld [vmem:[#allocation5 + $0xc] sm:$0xf]
    %v74 = vld [vmem:[#allocation5 + $0x10] sm:$0xf]
    %v75 = vld [vmem:[#allocation5 + $0x14] sm:$0xf]
    %v76 = vld [vmem:[#allocation5 + $0x18] sm:$0xf]
    %v77 = vld [vmem:[#allocation5 + $0x1c] sm:$0xf]
    %v78 = vld [vmem:[#allocation5 + $0x20] sm:$0xf]
    %v79 = vld [vmem:[#allocation5 + $0x24] sm:$0xf]
    %v80 = vld [vmem:[#allocation5 + $0x28] sm:$0xf]
    %v81 = vld [vmem:[#allocation5 + $0x2c] sm:$0xf]
    %v82 = vld [vmem:[#allocation5 + $0x30] sm:$0xf]
    %v83 = vld [vmem:[#allocation5 + $0x34] sm:$0xf]
    %v84 = vld [vmem:[#allocation5 + $0x38] sm:$0xf]
    %v85 = vld [vmem:[#allocation5 + $0x3c] sm:$0xf]
    %v86 = vld [vmem:[#allocation5 + $0x40] sm:$0xf]
    %v87 = vld [vmem:[#allocation5 + $0x44] sm:$0xf]
    %v88 = vld [vmem:[#allocation5 + $0x48] sm:$0xf]
    %v89 = vld [vmem:[#allocation5 + $0x4c] sm:$0xf]
    %v90 = vld [vmem:[#allocation5 + $0x50] sm:$0xf]
    %v91 = vld [vmem:[#allocation5 + $0x54] sm:$0xf]
    %v92 = vld [vmem:[#allocation5 + $0x58] sm:$0xf]
    %v93 = vld [vmem:[#allocation5 + $0x5c] sm:$0xf]
    %v94 = vld [vmem:[#allocation5 + $0x60] sm:$0xf]
    %v95 = vld [vmem:[#allocation5 + $0x64] sm:$0xf]
    %v96 = vld [vmem:[#allocation5 + $0x68] sm:$0xf]
    %v97 = vld [vmem:[#allocation5 + $0x6c] sm:$0xf]
    %v98 = vld [vmem:[#allocation5 + $0x70] sm:$0xf]
    %v99 = vld [vmem:[#allocation5 + $0x74] sm:$0xf]
    %v100 = vld [vmem:[#allocation5 + $0x78] sm:$0xf]
    %v101 = vld [vmem:[#allocation5 + $0x7c] sm:$0xf]
    %v102 = vld [vmem:[#allocation5 + $0x80] sm:$0xf]
    %v103 = vld [vmem:[#allocation5 + $0x84] sm:$0xf]
    %v104 = vld [vmem:[#allocation5 + $0x88] sm:$0xf]
    %v105 = vld [vmem:[#allocation5 + $0x8c] sm:$0xf]
    %v106 = vld [vmem:[#allocation5 + $0x90] sm:$0xf]
    %v107 = vld [vmem:[#allocation5 + $0x94] sm:$0xf]
    %v108 = vld [vmem:[#allocation5 + $0x98] sm:$0xf]
    %v109 = vld [vmem:[#allocation5 + $0x9c] sm:$0xf]
    %v110 = vld [vmem:[#allocation5 + $0xa0] sm:$0xf]
    %v111 = vld [vmem:[#allocation5 + $0xa4] sm:$0xf]
    %v112 = vld [vmem:[#allocation5 + $0xa8] sm:$0xf]
    %v113 = vld [vmem:[#allocation5 + $0xac] sm:$0xf]
    %v114 = vld [vmem:[#allocation5 + $0xb0] sm:$0xf]
    %v115 = vld [vmem:[#allocation5 + $0xb4] sm:$0xf]
    %v116 = vld [vmem:[#allocation5 + $0xb8] sm:$0xf]
    %v117 = vld [vmem:[#allocation5 + $0xbc] sm:$0xf]
    %v118 = vld [vmem:[#allocation5 + $0xc0] sm:$0xf]
    %v119 = vld [vmem:[#allocation5 + $0xc4] sm:$0xf]
    %v120 = vld [vmem:[#allocation5 + $0xc8] sm:$0xf]
    %v121 = vld [vmem:[#allocation5 + $0xcc] sm:$0xf]
    %v122 = vld [vmem:[#allocation5 + $0xd0] sm:$0xf]
    %v123 = vld [vmem:[#allocation5 + $0xd4] sm:$0xf]
    %v124 = vld [vmem:[#allocation5 + $0xd8] sm:$0xf]
    %v125 = vld [vmem:[#allocation5 + $0xdc] sm:$0xf]
    %v126 = vld [vmem:[#allocation5 + $0xe0] sm:$0xf]
    %v127 = vld [vmem:[#allocation5 + $0xe4] sm:$0xf]
    %v128 = vld [vmem:[#allocation5 + $0xe8] sm:$0xf]
    %v129 = vld [vmem:[#allocation5 + $0xec] sm:$0xf]
    %v130 = vld [vmem:[#allocation5 + $0xf0] sm:$0xf]
    %v131 = vld [vmem:[#allocation5 + $0xf4] sm:$0xf]
    %v132 = vld [vmem:[#allocation5 + $0xf8] sm:$0xf]
    %v133 = vld [vmem:[#allocation5 + $0xfc] sm:$0xf]
    %v198 = vunpack.c.l.b16 %v70
    %v199 = vunpack.c.l.b16 %v71
    %v200 = vunpack.c.l.b16 %v72
    %v201 = vunpack.c.l.b16 %v73
    %v202 = vunpack.c.l.b16 %v74
    %v203 = vunpack.c.l.b16 %v75
    %v204 = vunpack.c.l.b16 %v76
    %v205 = vunpack.c.l.b16 %v77
    %v206 = vunpack.c.l.b16 %v78
    %v207 = vunpack.c.l.b16 %v79
    %v208 = vunpack.c.l.b16 %v80
    %v209 = vunpack.c.l.b16 %v81
    %v210 = vunpack.c.l.b16 %v82
    %v211 = vunpack.c.l.b16 %v83
    %v212 = vunpack.c.l.b16 %v84
    %v213 = vunpack.c.l.b16 %v85
    %v214 = vunpack.c.l.b16 %v86
    %v215 = vunpack.c.l.b16 %v87
    %v216 = vunpack.c.l.b16 %v88
    %v217 = vunpack.c.l.b16 %v89
    %v218 = vunpack.c.l.b16 %v90
    %v219 = vunpack.c.l.b16 %v91
    %v220 = vunpack.c.l.b16 %v92
    %v221 = vunpack.c.l.b16 %v93
    %v222 = vunpack.c.l.b16 %v94
    %v223 = vunpack.c.l.b16 %v95
    %v224 = vunpack.c.l.b16 %v96
    %v225 = vunpack.c.l.b16 %v97
    %v226 = vunpack.c.l.b16 %v98
    %v227 = vunpack.c.l.b16 %v99
    %v228 = vunpack.c.l.b16 %v100
    %v229 = vunpack.c.l.b16 %v101
    %v230 = vunpack.c.l.b16 %v102
    %v231 = vunpack.c.l.b16 %v103
    %v232 = vunpack.c.l.b16 %v104
    %v233 = vunpack.c.l.b16 %v105
    %v234 = vunpack.c.l.b16 %v106
    %v235 = vunpack.c.l.b16 %v107
    %v236 = vunpack.c.l.b16 %v108
    %v237 = vunpack.c.l.b16 %v109
    %v238 = vunpack.c.l.b16 %v110
    %v239 = vunpack.c.l.b16 %v111
    %v240 = vunpack.c.l.b16 %v112
    %v241 = vunpack.c.l.b16 %v113
    %v242 = vunpack.c.l.b16 %v114
    %v243 = vunpack.c.l.b16 %v115
    %v244 = vunpack.c.l.b16 %v116
    %v245 = vunpack.c.l.b16 %v117
    %v246 = vunpack.c.l.b16 %v118
    %v247 = vunpack.c.l.b16 %v119
    %v248 = vunpack.c.l.b16 %v120
    %v249 = vunpack.c.l.b16 %v121
    %v250 = vunpack.c.l.b16 %v122
    %v251 = vunpack.c.l.b16 %v123
    %v252 = vunpack.c.l.b16 %v124
    %v253 = vunpack.c.l.b16 %v125
    %v254 = vunpack.c.l.b16 %v126
    %v255 = vunpack.c.l.b16 %v127
    %v256 = vunpack.c.l.b16 %v128
    %v257 = vunpack.c.l.b16 %v129
    %v258 = vunpack.c.l.b16 %v130
    %v259 = vunpack.c.l.b16 %v131
    %v260 = vunpack.c.l.b16 %v132
    %v261 = vunpack.c.l.b16 %v133
    %v262 = vpack.c.b16 %v199, %v198
    %v263 = vpack.c.b16 %v201, %v200
    %v264 = vpack.c.b16 %v203, %v202
    %v265 = vpack.c.b16 %v205, %v204
    %v266 = vpack.c.b16 %v207, %v206
    %v267 = vpack.c.b16 %v209, %v208
    %v268 = vpack.c.b16 %v211, %v210
    %v269 = vpack.c.b16 %v213, %v212
    %v270 = vpack.c.b16 %v215, %v214
    %v271 = vpack.c.b16 %v217, %v216
    %v272 = vpack.c.b16 %v219, %v218
    %v273 = vpack.c.b16 %v221, %v220
    %v274 = vpack.c.b16 %v223, %v222
    %v275 = vpack.c.b16 %v225, %v224
    %v276 = vpack.c.b16 %v227, %v226
    %v277 = vpack.c.b16 %v229, %v228
    %v278 = vpack.c.b16 %v231, %v230
    %v279 = vpack.c.b16 %v233, %v232
    %v280 = vpack.c.b16 %v235, %v234
    %v281 = vpack.c.b16 %v237, %v236
    %v282 = vpack.c.b16 %v239, %v238
    %v283 = vpack.c.b16 %v241, %v240
    %v284 = vpack.c.b16 %v243, %v242
    %v285 = vpack.c.b16 %v245, %v244
    %v286 = vpack.c.b16 %v247, %v246
    %v287 = vpack.c.b16 %v249, %v248
    %v288 = vpack.c.b16 %v251, %v250
    %v289 = vpack.c.b16 %v253, %v252
    %v290 = vpack.c.b16 %v255, %v254
    %v291 = vpack.c.b16 %v257, %v256
    %v292 = vpack.c.b16 %v259, %v258
    %v293 = vpack.c.b16 %v261, %v260
    %326 = vmatprep.subr.bf16.mxu0 0
    %327 = vmatpush1.bf16.msra.mxu0 %v262
    %328 = vmatprep.subr.bf16.mxu0 0
    %329 = vmatpush1.bf16.msra.mxu0 %v263
    %330 = vmatprep.subr.bf16.mxu0 0
    %331 = vmatpush1.bf16.msra.mxu0 %v264
    %332 = vmatprep.subr.bf16.mxu0 0
    %333 = vmatpush1.bf16.msra.mxu0 %v265
    %334 = vmatprep.subr.bf16.mxu0 0
    %335 = vmatpush1.bf16.msra.mxu0 %v266
    %336 = vmatprep.subr.bf16.mxu0 0
    %337 = vmatpush1.bf16.msra.mxu0 %v267
    %338 = vmatprep.subr.bf16.mxu0 0
    %339 = vmatpush1.bf16.msra.mxu0 %v268
    %340 = vmatprep.subr.bf16.mxu0 0
    %341 = vmatpush1.bf16.msra.mxu0 %v269
    %342 = vmatprep.subr.bf16.mxu0 0
    %343 = vmatpush1.bf16.msra.mxu0 %v270
    %344 = vmatprep.subr.bf16.mxu0 0
    %345 = vmatpush1.bf16.msra.mxu0 %v271
    %346 = vmatprep.subr.bf16.mxu0 0
    %347 = vmatpush1.bf16.msra.mxu0 %v272
    %348 = vmatprep.subr.bf16.mxu0 0
    %349 = vmatpush1.bf16.msra.mxu0 %v273
    %350 = vmatprep.subr.bf16.mxu0 0
    %351 = vmatpush1.bf16.msra.mxu0 %v274
    %352 = vmatprep.subr.bf16.mxu0 0
    %353 = vmatpush1.bf16.msra.mxu0 %v275
    %354 = vmatprep.subr.bf16.mxu0 0
    %355 = vmatpush1.bf16.msra.mxu0 %v276
    %356 = vmatprep.subr.bf16.mxu0 0
    %357 = vmatpush1.bf16.msra.mxu0 %v277
    %358 = vmatprep.mubr.bf16.mxu0 %v67
    %359 = vmatmul.mubr.bf16.gmra.mrb[0].mxu0 %v66
    %v360 = vpop.f32.mrb[0].mxu0
    %v361 = vadd.f32 0.0, %v360
    %v362 = vpop.f32.mrb[0].mxu0
    %v363 = vpop.f32.mrb[0].mxu0
    %v364 = vadd.f32 0.0, %v363
    %v365 = vpop.f32.mrb[0].mxu0
    %366 = vdwg.mxu0
    %367 = vmatprep.subr.bf16.mxu0 0
    %368 = vmatpush1.bf16.msra.mxu0 %v278
    %369 = vmatprep.subr.bf16.mxu0 0
    %370 = vmatpush1.bf16.msra.mxu0 %v279
    %371 = vmatprep.subr.bf16.mxu0 0
    %372 = vmatpush1.bf16.msra.mxu0 %v280
    %373 = vmatprep.subr.bf16.mxu0 0
    %374 = vmatpush1.bf16.msra.mxu0 %v281
    %375 = vmatprep.subr.bf16.mxu0 0
    %376 = vmatpush1.bf16.msra.mxu0 %v282
    %377 = vmatprep.subr.bf16.mxu0 0
    %378 = vmatpush1.bf16.msra.mxu0 %v283
    %379 = vmatprep.subr.bf16.mxu0 0
    %380 = vmatpush1.bf16.msra.mxu0 %v284
    %381 = vmatprep.subr.bf16.mxu0 0
    %382 = vmatpush1.bf16.msra.mxu0 %v285
    %383 = vmatprep.subr.bf16.mxu0 0
    %384 = vmatpush1.bf16.msra.mxu0 %v286
    %385 = vmatprep.subr.bf16.mxu0 0
    %386 = vmatpush1.bf16.msra.mxu0 %v287
    %387 = vmatprep.subr.bf16.mxu0 0
    %388 = vmatpush1.bf16.msra.mxu0 %v288
    %389 = vmatprep.subr.bf16.mxu0 0
    %390 = vmatpush1.bf16.msra.mxu0 %v289
    %391 = vmatprep.subr.bf16.mxu0 0
    %392 = vmatpush1.bf16.msra.mxu0 %v290
    %393 = vmatprep.subr.bf16.mxu0 0
    %394 = vmatpush1.bf16.msra.mxu0 %v291
    %395 = vmatprep.subr.bf16.mxu0 0
    %396 = vmatpush1.bf16.msra.mxu0 %v292
    %397 = vmatprep.subr.bf16.mxu0 0
    %398 = vmatpush1.bf16.msra.mxu0 %v293
    %399 = vmatprep.mubr.bf16.mxu0 %v69
    %400 = vmatmul.mubr.bf16.gmra.mrb[0].mxu0 %v68
    %v401 = vpop.f32.mrb[0].mxu0
    %v402 = vadd.f32 %v361, %v401
    %v403 = vpop.f32.mrb[0].mxu0
    %v404 = vpop.f32.mrb[0].mxu0
    %v405 = vadd.f32 %v364, %v404
    %v406 = vpop.f32.mrb[0].mxu0
    %407 = vdwg.mxu0
    %v408 = vadd.f32 %v56, %v402
    %v409 = vadd.f32 %v57, %v405
    %410 = vst [vmem:[#allocation7] sm:$0xff] %v408
    %411 = vst [vmem:[#allocation7 + $0x8] sm:$0xff] %v409
    // Predicated region
    $region34: #{tpu_custom_call.1} parent=1 // pred_check
      %p412 = pneg %p50
    $region35: #{tpu_custom_call.1} parent=1 // pred_check_branch
      %414 = sbr.rel (%p412) target = $region37
    $region36: #{tpu_custom_call.1} parent=1 // pred_region
      %v415 = vld [vmem:[#allocation7] sm:$0xff]
      %v416 = vld [vmem:[#allocation7 + $0x8] sm:$0xff]
      %v417 = vld [vmem:[%s2] sm:$0x1]
      %v419 = vlaneseq
      %v420 = vshrl.u32 %v419, 7
      %v421 = vsub.s32 0, %v420
      %v422 = vrot.slane %v417, %v421
      %v424 = vadd.f32 %v415, %v422
      %v425 = vadd.f32 %v416, %v422
      %426 = vadd.xlane.f32.xlu0 %v424
      %v427 = vpop.xlane.xlu0 %426
      %428 = vadd.xlane.f32.xlu0 %v425
      %v429 = vpop.xlane.xlu0 %428
      %v430 = vrcp.pop 128.0
      %v431 = vmul.f32 %v427, %v430
      %v432 = vmul.f32 %v429, %v430
      %v433 = vsub.f32 %v424, %v431
      %v434 = vsub.f32 %v425, %v432
      %v435 = vmul.f32 %v433, %v433
      %v436 = vmul.f32 %v434, %v434
      %437 = vadd.xlane.f32.xlu0 %v435
      %v438 = vpop.xlane.xlu0 %437
      %439 = vadd.xlane.f32.xlu0 %v436
      %v440 = vpop.xlane.xlu0 %439
      %v441 = vrcp.pop 127.0
      %v442 = vmul.f32 %v438, %v441
      %v443 = vmul.f32 %v440, %v441
      %v444 = vrsqrt.pop %v442
      %v445 = vmul.f32 %v442, %v444
      %vm446 = vcmp.eq.f32.partialorder %v442, inf
      %v447 = vsel %vm446, %v442, %v445
      %vm448 = vcmp.eq.f32.partialorder %v442, 0.0
      %v449 = vand.u32 %v442, 2147483648
      %v450 = vsel %vm448, %v449, %v447
      %v451 = vrsqrt.pop %v443
      %v452 = vmul.f32 %v443, %v451
      %vm453 = vcmp.eq.f32.partialorder %v443, inf
      %v454 = vsel %vm453, %v443, %v452
      %vm455 = vcmp.eq.f32.partialorder %v443, 0.0
      %v456 = vand.u32 %v443, 2147483648
      %v457 = vsel %vm455, %v456, %v454
      %v458 = vadd.f32 %v450, 1e-05
      %v459 = vadd.f32 %v457, 1e-05
      %v460 = vrcp.pop %v458
      %v461 = vmul.f32 1.0, %v460
      %v462 = vrcp.pop %v459
      %v463 = vmul.f32 1.0, %v462
      %v464 = vmul.f32 %v433, %v461
      %v465 = vmul.f32 %v434, %v463
      %v466 = vld [vmem:[%s3] sm:$0x1]
      %v468 = vlaneseq
      %v469 = vshrl.u32 %v468, 7
      %v470 = vsub.s32 0, %v469
      %v471 = vrot.slane %v466, %v470
      %v473 = vmul.f32 %v464, %v471
      %v474 = vmul.f32 %v465, %v471
      %v475 = vld [vmem:[%s4] sm:$0x1]
      %v477 = vlaneseq
      %v478 = vshrl.u32 %v477, 7
      %v479 = vsub.s32 0, %v478
      %v480 = vrot.slane %v475, %v479
      %v482 = vadd.f32 %v473, %v480
      %v483 = vadd.f32 %v474, %v480
      %v484 = vmax.f32 %v482, 0.0
      %v485 = vmax.f32 %v483, 0.0
      %486 = vst [vmem:[#allocation7] sm:$0xff] %v484
      %487 = vst [vmem:[#allocation7 + $0x8] sm:$0xff] %v485
    $region37: #{tpu_custom_call.1} parent=1 // pred_fallthru
      _
    // Predicated region
    $region38: #{tpu_custom_call.1} parent=1 // pred_check
      _
    $region39: #{tpu_custom_call.1} parent=1 // pred_check_branch
      %489 = sbr.rel (0) target = $region41
    $region40: #{tpu_custom_call.1} parent=1 // pred_region
      %s491 = ssub.s32 256, 256
      %492 = vsyncadd [#allocation4], %s491
      %s493 = sshll.u32 [#allocation7], 4
      %s494 = int_to_ptr.vmem [resolvable:$true] %s493
      %499 = dma.vmem_to_hbm [thread:$0]  %s494, 256, %s5, [#allocation4], 128, 128, 8
    $region41: #{tpu_custom_call.1} parent=1 // pred_fallthru
      _
    // Predicated region
    $region42: #{tpu_custom_call.1} parent=1 // pred_check
      _
    $region43: #{tpu_custom_call.1} parent=1 // pred_check_branch
      %501 = sbr.rel (0) target = $region45
    $region44: #{tpu_custom_call.1} parent=1 // pred_region
      %502 = dma.done [#allocation4], 256
    $region45: #{tpu_custom_call.1} parent=1 // pred_fallthru
      _
    %503 = vsyncpa [#allocation3], 1
    %504 = vsyncpa [#allocation6], 1
    %505 = vsyncpa [#allocation4], 1

</llo_original>
